<compile_context>
chip_gen: v7x
topology: tpu7x:2x2x1
jax: 0.10.0
libtpu: 0.0.40
codegen_flags: <defaults>
</compile_context>

<pallas_src>
import jax
import jax.numpy as jnp
from jax.experimental import pallas as pl
from jax.experimental.pallas import tpu as pltpu

_LANES = 128
_SUBLANES = 8
_TILE = _SUBLANES * _LANES  # 1024 f32 per slab


def _bploss_kernel(xc_ref, o_ref):
    # xc_ref: (2, R, 128) f32 in VMEM. Slab 0 = values, slab 1 = coefficients.
    x = xc_ref[0]  # (R, 128)
    c = xc_ref[1]  # (R, 128)
    # Per-element contribution; padded lanes (x == 0, c == 0) give exactly 0.
    contrib = 0.5 * x * jnp.exp(-c) + c
    o_ref[0, 0] = jnp.sum(contrib)


def _pack_inputs(loss, std, coefficient, coefficient_part2):
    """Pack (loss||std, coef||coef2) into one (2, R, 128) f32 VMEM slab."""
    x = jnp.concatenate([jnp.ravel(loss), jnp.ravel(std)]).astype(jnp.float32)
    c = jnp.concatenate(
        [jnp.ravel(coefficient), jnp.ravel(coefficient_part2)]
    ).astype(jnp.float32)
    n = x.shape[0]
    if c.shape[0] != n:
        raise ValueError("loss/std and coefficient vectors must pair 1:1")
    rows = max(1, pl.cdiv(n, _TILE)) * _SUBLANES  # multiple of 8 sublanes
    pad = rows * _LANES - n
    x_p = jnp.pad(x, (0, pad)).reshape(rows, _LANES)
    c_p = jnp.pad(c, (0, pad)).reshape(rows, _LANES)
    return jnp.stack([x_p, c_p], axis=0)  # (2, rows, 128)


def _bploss_pallas(loss, std, coefficient, coefficient_part2):
    packed = _pack_inputs(loss, std, coefficient, coefficient_part2)
    n_elem = packed.shape[1] * packed.shape[2]
    out = pl.pallas_call(
        _bploss_kernel,
        out_shape=jax.ShapeDtypeStruct((1, 1), jnp.float32),
        in_specs=[pl.BlockSpec(memory_space=pltpu.MemorySpace.VMEM)],
        out_specs=pl.BlockSpec(memory_space=pltpu.MemorySpace.SMEM),
        cost_estimate=pl.CostEstimate(
            flops=3 * n_elem,
            transcendentals=n_elem,
            bytes_accessed=2 * n_elem * 4 + 4,
        ),
    )(packed)
    return out[0, 0]


# ----- closed-form custom_vjp so the trainable coefficients are usable -----
@jax.custom_vjp
def bploss_forward(loss, std, coefficient, coefficient_part2):
    """Pallas equivalent of bploss.forward. Returns a 0-d f32 scalar."""
    return _bploss_pallas(loss, std, coefficient, coefficient_part2)


def _bploss_fwd(loss, std, coefficient, coefficient_part2):
    out = _bploss_pallas(loss, std, coefficient, coefficient_part2)
    return out, (loss, std, coefficient, coefficient_part2)


def _bploss_bwd(res, g):
    loss, std, coef, coef2 = res
    w1 = 0.5 * jnp.exp(-coef.astype(jnp.float32))
    w2 = 0.5 * jnp.exp(-coef2.astype(jnp.float32))
    d_loss = (g * w1).astype(loss.dtype)
    d_std = (g * w2).astype(std.dtype)
    d_coef = (g * (1.0 - loss.astype(jnp.float32) * w1)).astype(coef.dtype)
    d_coef2 = (g * (1.0 - std.astype(jnp.float32) * w2)).astype(coef2.dtype)
    return d_loss, d_std, d_coef, d_coef2


bploss_forward.defvjp(_bploss_fwd, _bploss_bwd)


class BPLoss:
    """JAX mirror of the PyTorch bploss module (parameters init to zeros)."""

    def __init__(self, length=None, args=None):
        self.length = length
        # Stored pre-packed (the eleven scalar nn.Parameters of the reference
        # module are the entries of these two vectors).
        self.coefficient = jnp.zeros((6,), jnp.float32)       # c1..c6
        self.coefficient_part2 = jnp.zeros((5,), jnp.float32)  # c11..c55

    def forward(self, loss, std):
        return bploss_forward(loss, std, self.coefficient, self.coefficient_part2)


def bploss_ref(loss, std, coefficient, coefficient_part2):
    """Pure-JAX reference mirroring the PyTorch module exactly."""
    bp = jnp.sum(loss * (1.0 / (2.0 * jnp.exp(coefficient)))) + jnp.sum(coefficient)
    st = jnp.sum(std * (1.0 / (2.0 * jnp.exp(coefficient_part2)))) + jnp.sum(
        coefficient_part2
    )
    return bp + st


if __name__ == "__main__":
    key = jax.random.PRNGKey(0)
    k1, k2, k3, k4 = jax.random.split(key, 4)

    # forward implies loss has 6 entries (one per coefficient1..6),
    # std has 5 entries (one per coefficient11..55).
    loss = jax.random.normal(k1, (6,), dtype=jnp.float32)
    std = jax.random.normal(k2, (5,), dtype=jnp.float32)

    # Case 1: module as constructed (all coefficients zero, like nn.Parameter init).
    mod = BPLoss(length=6, args=None)
    out0 = mod.forward(loss, std)
    jax.block_until_ready(out0)
    ref0 = bploss_ref(loss, std, jnp.zeros((6,), jnp.float32), jnp.zeros((5,), jnp.float32))
    assert jnp.allclose(out0, ref0, rtol=1e-5, atol=1e-6), (out0, ref0)

    # Case 2: nonzero coefficients (as after training) to exercise the exp path.
    coef = 0.1 * jax.random.normal(k3, (6,), dtype=jnp.float32)
    coef2 = 0.1 * jax.random.normal(k4, (5,), dtype=jnp.float32)
    out1 = bploss_forward(loss, std, coef, coef2)
    jax.block_until_ready(out1)
    ref1 = bploss_ref(loss, std, coef, coef2)
    assert jnp.allclose(out1, ref1, rtol=1e-5, atol=1e-6), (out1, ref1)

    # Case 3: gradients w.r.t. the trainable coefficients (custom_vjp path).
    g_k = jax.grad(bploss_forward, argnums=(2, 3))(loss, std, coef, coef2)
    g_r = jax.grad(bploss_ref, argnums=(2, 3))(loss, std, coef, coef2)
    jax.block_until_ready(g_k)
    assert jnp.allclose(g_k[0], g_r[0], rtol=1e-5, atol=1e-6)
    assert jnp.allclose(g_k[1], g_r[1], rtol=1e-5, atol=1e-6)

    print("KERNEL_OK")
</pallas_src>

<mosaic_0001>
module attributes {stable_mosaic.version = 11 : i64} {
  func.func @_bploss_kernel(%arg0: memref<2x8x128xf32, #tpu.memory_space<vmem>>, %arg1: memref<1x1xf32, #tpu.memory_space<smem>>) attributes {dimension_semantics = [], scalar_prefetch = 0 : i64, scratch_operands = 0 : i64, tpu.core_type = #tpu.core_type<tc>} {
    %c0 = arith.constant 0 : index
    %c0_0 = arith.constant 0 : index
    %c0_1 = arith.constant 0 : index
    %0 = vector.load %arg0[%c0, %c0_0, %c0_1] : memref<2x8x128xf32, #tpu.memory_space<vmem>>, vector<1x8x128xf32>
    %1 = vector.shape_cast %0 : vector<1x8x128xf32> to vector<8x128xf32>
    %c1 = arith.constant 1 : index
    %c0_2 = arith.constant 0 : index
    %c0_3 = arith.constant 0 : index
    %2 = vector.load %arg0[%c1, %c0_2, %c0_3] : memref<2x8x128xf32, #tpu.memory_space<vmem>>, vector<1x8x128xf32>
    %3 = vector.shape_cast %2 : vector<1x8x128xf32> to vector<8x128xf32>
    %cst = arith.constant 5.000000e-01 : f32
    %4 = vector.broadcast %cst : f32 to vector<8x128xf32>
    %5 = arith.mulf %4, %1 : vector<8x128xf32>
    %cst_4 = arith.constant 0.000000e+00 : f32
    %6 = vector.broadcast %cst_4 : f32 to vector<8x128xf32>
    %7 = arith.subf %6, %3 : vector<8x128xf32>
    %8 = math.exp %7 : vector<8x128xf32>
    %9 = arith.mulf %5, %8 : vector<8x128xf32>
    %10 = arith.addf %9, %3 : vector<8x128xf32>
    %11 = vector.shape_cast %10 : vector<8x128xf32> to vector<1x8x128xf32>
    %cst_5 = arith.constant dense<0.000000e+00> : vector<1xf32>
    %12 = vector.multi_reduction <add>, %11, %cst_5 [1, 2] : vector<1x8x128xf32> to vector<1xf32>
    %13 = vector.shape_cast %12 : vector<1xf32> to vector<1x1x1xf32>
    %14 = vector.extract %13[0, 0, 0] : f32 from vector<1x1x1xf32>
    %c0_6 = arith.constant 0 : index
    %c0_7 = arith.constant 0 : index
    %15 = memref.load %arg1[%c0_6, %c0_7] : memref<1x1xf32, #tpu.memory_space<smem>>
    memref.store %14, %arg1[%c0_6, %c0_7] : memref<1x1xf32, #tpu.memory_space<smem>>
    return
  }
}

</mosaic_0001>

<llo_original>
// kernel: tpu_custom_call.1
$region0: #{tpu_custom_call.1}
  #allocation0 [shape = 'u32[]', space=smem, size = 0x4, offset = 0x4, fixed_abs, tag = 'smem constant byte address 0x4 - core index']
  #allocation1 [shape = 'u32[144,128]{1,0:T(1,128)}', space=vmem, size = 0x12000, scoped, tag = 'internal scratch']
  %s0 = inlined_call_operand.hbm [shape: f32[2,8,128], index: 0, kind: input, shape index: {}]
  %s1 = inlined_call_operand.hbm [shape: f32[1,1], index: 1, kind: output, shape index: {}]
  %s2 = sld [smem:[#allocation0]]
  $region18: #{tpu_custom_call.1} parent=0
    _
  %s4 = ssub.s32 1, %s2
  %s5 = scalar_select 0, %s4, %s2
  $region1: #{tpu_custom_call.1} parent=0
    #allocation2 [shape = 'u8[8192]{0}', space=vmem, size = 0x2000, scoped, tag = 'input window, operand 0, single buffered']
    #allocation3 [shape = 's32[1]{0}', space=sflag, size = 0x4, scoped, tag = 'scoped memory for tpu_custom_call.1']
    #allocation4 [shape = 's32[1]{0}', space=sflag, size = 0x4, scoped, tag = 'scoped memory for tpu_custom_call.1']
    #allocation5 [shape = 'u8[512]{0}', space=smem, size = 0x200, scoped, tag = 'output window, operand 0, single buffered']
    %6 = vsyncpa [#allocation3], 0
    %7 = vsyncpa [#allocation4], 0
    // Predicated region
    $region2: #{tpu_custom_call.1} parent=1 // pred_check
      _
    $region3: #{tpu_custom_call.1} parent=1 // pred_check_branch
      %9 = sbr.rel (0) target = $region5
    $region4: #{tpu_custom_call.1} parent=1 // pred_region
      %s11 = ssub.s32 256, 256
      %12 = vsyncadd [#allocation3], %s11
      %s13 = sshll.u32 [#allocation2], 4
      %s14 = int_to_ptr.vmem [resolvable:$true] %s13
      %19 = dma.hbm_to_vmem [thread:$0]  %s0, 256, %s14, [#allocation3], 128, 128, 8
    $region5: #{tpu_custom_call.1} parent=1 // pred_fallthru
      _
    // Predicated region
    $region6: #{tpu_custom_call.1} parent=1 // pred_check
      _
    $region7: #{tpu_custom_call.1} parent=1 // pred_check_branch
      %21 = sbr.rel (0) target = $region9
    $region8: #{tpu_custom_call.1} parent=1 // pred_region
      %22 = dma.done [#allocation3], 256
    $region9: #{tpu_custom_call.1} parent=1 // pred_fallthru
      _
    %v23 = vld [vmem:[#allocation2] sm:$0xff]
    %s24 = scalar_lea.vmem [#allocation2], 8
    %v25 = vld [vmem:[%s24] sm:$0xff]
    %v26 = vmul.f32 %v23, 0.5
    %v27 = vsub.f32 0.0, %v25
    %v28 = vmul.f32 %v27, 1.442695
    %v29 = vpow.pop %v28
    %v30 = vmul.f32 %v26, %v29
    %v31 = vadd.f32 %v30, %v25
    %32 = vadd.xlane.f32.xlu0 %v31
    %v33 = vpop.xlane.xlu0 %32
    %v34 = vrot.slane %v33, 4
    %v35 = vadd.f32 %v33, %v34
    %v36 = vrot.slane %v35, 2
    %v37 = vadd.f32 %v35, %v36
    %v38 = vrot.slane %v37, 1
    %v39 = vadd.f32 %v37, %v38
    %s40 = vtos %v39
    %s41 = scalar_lea.smem [#allocation5], 0
    %42 = sst [smem:[%s41]] %s40
    // Predicated region
    $region10: #{tpu_custom_call.1} parent=1 // pred_check
      _
    $region11: #{tpu_custom_call.1} parent=1 // pred_check_branch
      %44 = sbr.rel (0) target = $region13
    $region12: #{tpu_custom_call.1} parent=1 // pred_region
      %s46 = ssub.s32 16, 16
      %47 = vsyncadd [#allocation4], %s46
      %50 = dma.smem_to_hbm [#allocation5], 16, %s1, [#allocation4]
    $region13: #{tpu_custom_call.1} parent=1 // pred_fallthru
      _
    // Predicated region
    $region14: #{tpu_custom_call.1} parent=1 // pred_check
      _
    $region15: #{tpu_custom_call.1} parent=1 // pred_check_branch
      %52 = sbr.rel (0) target = $region17
    $region16: #{tpu_custom_call.1} parent=1 // pred_region
      %53 = dma.done [#allocation4], 16
    $region17: #{tpu_custom_call.1} parent=1 // pred_fallthru
      _
    %54 = sfence
    %55 = vsyncpa [#allocation3], 1
    %56 = vsyncpa [#allocation4], 1

</llo_original>
